<compile_context>
chip_gen: v6e
topology: v6e:2x2x1
jax: 0.10.0
libtpu: 0.0.40
codegen_flags: <defaults>
</compile_context>

<pallas_src>
import numpy as np
import jax
import jax.numpy as jnp
from jax.experimental import pallas as pl
from jax.experimental.pallas import tpu as pltpu


# ----------------------------- Pallas kernel ---------------------------------
def _tt_ae_kernel(x_ref, w_ref, b_ref, o_ref):
    """out = sigmoid(x @ W_total + b_total) for one (bm, 256) batch tile.

    x: f32 (cast to bf16 for the MXU), W_total: bf16, accumulation: f32,
    bias add + sigmoid epilogue: f32 (v5e VPU/EUP have no bf16 path).
    """
    acc = jnp.dot(x_ref[...].astype(jnp.bfloat16), w_ref[...],
                  preferred_element_type=jnp.float32)
    o_ref[...] = jax.nn.sigmoid(acc + b_ref[...]).astype(o_ref.dtype)


def fused_tt_autoencoder(x, w_total, b_total, *, bm_cap=1024):
    """Single pallas_call computing sigmoid(x @ W_total + b_total).

    x:       (M, K) float32
    w_total: (K, N) bfloat16  (pre-composed chain of all 7 affine layers)
    b_total: (1, N) float32   (pre-composed bias)
    """
    M, K = x.shape
    Kw, N = w_total.shape
    assert K == Kw

    # Batch tile: big enough to amortize per-step overhead, multiple of 8 sublanes.
    bm = min(M, bm_cap)
    bm = max(8, ((bm + 7) // 8) * 8)
    pad = (-M) % bm
    if pad:
        x = jnp.pad(x, ((0, pad), (0, 0)))
    Mp = M + pad
    grid = (Mp // bm,)

    out = pl.pallas_call(
        _tt_ae_kernel,
        out_shape=jax.ShapeDtypeStruct((Mp, N), jnp.float32),
        grid=grid,
        in_specs=[
            pl.BlockSpec((bm, K), lambda i: (i, 0)),   # batch tile (pipelined)
            pl.BlockSpec((K, N), lambda i: (0, 0)),    # weight: same block every step
            pl.BlockSpec((1, N), lambda i: (0, 0)),    # bias:   same block every step
        ],
        out_specs=pl.BlockSpec((bm, N), lambda i: (i, 0)),  # lane-dense (bm, 256)
        compiler_params=pltpu.CompilerParams(
            dimension_semantics=("parallel",)),
        cost_estimate=pl.CostEstimate(
            flops=2 * Mp * K * N,
            transcendentals=Mp * N,
            bytes_accessed=(Mp * K * 4 + Mp * N * 4
                            + w_total.size * 2 + b_total.size * 4)),
    )(x, w_total, b_total)

    return out[:M] if pad else out


# --------------------------- TT parameter setup ------------------------------
def init_tt_linear(key, in_tensor, out_tensor, tt_rank):
    """Deterministically init TT cores + bias for TTLinear(in_tensor -> out_tensor)."""
    d = len(in_tensor)
    assert len(out_tensor) == d
    ranks = [1] + [tt_rank] * (d - 1) + [1]
    keys = jax.random.split(key, d + 1)
    cores = []
    for k in range(d):
        shape = (ranks[k], in_tensor[k], out_tensor[k], ranks[k + 1])
        scale = 1.0 / np.sqrt(float(np.prod(shape[:3])))
        cores.append(scale * jax.random.normal(keys[k], shape, jnp.float32))
    bias = 0.01 * jax.random.normal(keys[d], (int(np.prod(out_tensor)),), jnp.float32)
    return cores, bias


def tt_full_matrix(cores):
    """Contract TT cores into the dense (prod(in), prod(out)) weight matrix (f32)."""
    res = cores[0][0]  # (i1, o1, r1)
    for core in cores[1:]:
        P, Q, r = res.shape
        _, i, o, s = core.shape
        res = jnp.einsum("pqr,rios->piqos", res, core).reshape(P * i, Q * o, s)
    return res[..., 0]  # (in_features, out_features)


def build_layer_params(key, hidden_tensors, input_tensor, tt_rank):
    """Per-layer dense f32 weights + (1, N) f32 biases for all 7 layers."""
    layer_shapes = [
        (input_tensor, hidden_tensors[0]),       # encoder1[0]
        (hidden_tensors[0], hidden_tensors[1]),  # encoder1[1]
        (hidden_tensors[1], hidden_tensors[2]),  # encoder1[2]
        (hidden_tensors[2], hidden_tensors[1]),  # decoder1[0]
        (hidden_tensors[1], hidden_tensors[0]),  # decoder1[1]
        (hidden_tensors[0], input_tensor),       # decoder1[2]
    ]
    keys = jax.random.split(key, len(layer_shapes) + 1)
    weights, biases = [], []
    for k, (tin, tout) in zip(keys[:-1], layer_shapes):
        cores, bias = init_tt_linear(k, tin, tout, tt_rank)
        weights.append(tt_full_matrix(cores))            # f32
        biases.append(bias.reshape(1, -1))                # f32

    # final nn.Linear(prod(input_tensor), prod(input_tensor))
    n = int(np.prod(input_tensor))
    kw, kb = jax.random.split(keys[-1])
    w_lin = (1.0 / np.sqrt(n)) * jax.random.normal(kw, (n, n), jnp.float32)
    b_lin = (1.0 / np.sqrt(n)) * jax.random.normal(kb, (n,), jnp.float32)
    weights.append(w_lin)
    biases.append(b_lin.reshape(1, -1))
    return weights, biases


def compose_affine_chain(weights, biases):
    """Fold the purely-affine 7-layer chain into (W_total bf16, b_total f32).

    Composition is done entirely in f32; the single bf16 rounding happens once
    at the end (review correctness concern #2).
    """
    w = weights[0]
    b = biases[0]
    for wi, bi in zip(weights[1:], biases[1:]):
        w = w @ wi
        b = b @ wi + bi
    return w.astype(jnp.bfloat16), b.astype(jnp.float32)


# ------------------------------ forward pass ---------------------------------
@jax.jit
def tt_autoencoder_forward(w_total, b_total, inputs):
    """out = sigmoid(lin(decoder1(encoder1(inputs)))) — single fused Pallas kernel."""
    return fused_tt_autoencoder(inputs, w_total, b_total)


if __name__ == "__main__":
    # Small shapes consistent with the module:
    #   input_tensor   = (4, 8, 8)                        -> 256 input features
    #   hidden_tensors = [(4, 8, 4), (4, 4, 4), (2, 4, 4)] -> 128, 64, 32 features
    #   tt_rank = 2, batch = 8
    input_tensor = (4, 8, 8)
    hidden_tensors = [(4, 8, 4), (4, 4, 4), (2, 4, 4)]
    tt_rank = 2
    batch = 8
    n_feat = int(np.prod(input_tensor))

    key = jax.random.PRNGKey(0)
    k_params, k_inputs = jax.random.split(key)

    weights, biases = build_layer_params(k_params, hidden_tensors, input_tensor, tt_rank)
    w_total, b_total = compose_affine_chain(weights, biases)
    inputs = jax.random.normal(k_inputs, (batch, n_feat), jnp.float32)

    out = tt_autoencoder_forward(w_total, b_total, inputs)
    out = jax.block_until_ready(out)

    assert out.shape == (batch, n_feat), out.shape
    assert bool(jnp.all(jnp.isfinite(out)))
    assert bool(jnp.all((out >= 0.0) & (out <= 1.0)))  # sigmoid range

    # Cross-check against the true layer-wise f32 module semantics.
    ref = inputs
    for li, (w, b) in enumerate(zip(weights, biases)):
        ref = ref @ w + b
        if li == len(weights) - 1:
            ref = jax.nn.sigmoid(ref)
    max_err = float(jnp.max(jnp.abs(out - ref)))
    assert max_err < 1e-2, max_err

    print("KERNEL_OK")
</pallas_src>

<mosaic_0001>
module attributes {stable_mosaic.version = 11 : i64} {
  func.func @_tt_ae_kernel(%arg0: i32, %arg1: memref<8x256xf32, #tpu.memory_space<vmem>>, %arg2: memref<256x256xbf16, #tpu.memory_space<vmem>>, %arg3: memref<1x256xf32, #tpu.memory_space<vmem>>, %arg4: memref<8x256xf32, #tpu.memory_space<vmem>>) attributes {dimension_semantics = [#tpu.dimension_semantics<parallel>], iteration_bounds = array<i64: 1>, scalar_prefetch = 0 : i64, scratch_operands = 0 : i64, tpu.core_type = #tpu.core_type<tc>, window_params = [{transform_indices = @transform_0, window_bounds = array<i64: 8, 256>}, {pipeline_mode = #tpu.pipeline_mode<synchronous>, transform_indices = @transform_1, window_bounds = array<i64: 256, 256>}, {pipeline_mode = #tpu.pipeline_mode<synchronous>, transform_indices = @transform_2, window_bounds = array<i64: 1, 256>}, {transform_indices = @transform_3, window_bounds = array<i64: 8, 256>}]} {
    %c0 = arith.constant 0 : index
    %c0_0 = arith.constant 0 : index
    %0 = vector.load %arg1[%c0, %c0_0] : memref<8x256xf32, #tpu.memory_space<vmem>>, vector<8x256xf32>
    %1 = arith.truncf %0 : vector<8x256xf32> to vector<8x256xbf16>
    %c0_1 = arith.constant 0 : index
    %c0_2 = arith.constant 0 : index
    %2 = vector.load %arg2[%c0_1, %c0_2] : memref<256x256xbf16, #tpu.memory_space<vmem>>, vector<256x256xbf16>
    %cst = arith.constant dense<0.000000e+00> : vector<8x256xf32>
    %3 = tpu.matmul %1, %2, %cst {dimension_numbers = #tpu.dot_dimension_numbers<[1], [0], [0], [1], [0, 0, 1, 1], [], []>} : vector<8x256xbf16>, vector<256x256xbf16>, vector<8x256xf32> -> vector<8x256xf32>
    %c0_3 = arith.constant 0 : index
    %c0_4 = arith.constant 0 : index
    %4 = vector.load %arg3[%c0_3, %c0_4] : memref<1x256xf32, #tpu.memory_space<vmem>>, vector<1x256xf32>
    %5 = vector.broadcast %4 : vector<1x256xf32> to vector<8x256xf32>
    %6 = arith.addf %3, %5 : vector<8x256xf32>
    %7 = arith.negf %6 : vector<8x256xf32>
    %8 = math.exp %7 : vector<8x256xf32>
    %cst_5 = arith.constant 1.000000e+00 : f32
    %9 = vector.broadcast %cst_5 : f32 to vector<8x256xf32>
    %10 = arith.addf %9, %8 : vector<8x256xf32>
    %11 = arith.divf %9, %10 : vector<8x256xf32>
    %c0_6 = arith.constant 0 : index
    %c0_7 = arith.constant 0 : index
    %12 = vector.load %arg4[%c0_6, %c0_7] : memref<8x256xf32, #tpu.memory_space<vmem>>, vector<8x256xf32>
    tpu.vector_store %arg4[%c0_6, %c0_7], %11 {strides = array<i32>} : memref<8x256xf32, #tpu.memory_space<vmem>>, vector<8x256xf32>,
    return
  }
  func.func @transform_0(%arg0: i32) -> (i32, i32) {
    %c0_i32 = arith.constant 0 : i32
    %c0_i32_0 = arith.constant 0 : i32
    return %arg0, %c0_i32 : i32, i32
  }
  func.func @transform_1(%arg0: i32) -> (i32, i32) {
    %c0_i32 = arith.constant 0 : i32
    %c0_i32_0 = arith.constant 0 : i32
    %c0_i32_1 = arith.constant 0 : i32
    return %c0_i32, %c0_i32_0 : i32, i32
  }
  func.func @transform_2(%arg0: i32) -> (i32, i32) {
    %c0_i32 = arith.constant 0 : i32
    %c0_i32_0 = arith.constant 0 : i32
    %c0_i32_1 = arith.constant 0 : i32
    return %c0_i32, %c0_i32_0 : i32, i32
  }
  func.func @transform_3(%arg0: i32) -> (i32, i32) {
    %c0_i32 = arith.constant 0 : i32
    %c0_i32_0 = arith.constant 0 : i32
    return %arg0, %c0_i32 : i32, i32
  }
}

</mosaic_0001>

<llo_original>
// kernel: tt_autoencoder_forward.1
$region0: #{tt_autoencoder_forward.1}
  #allocation0 [shape = 'u32[]', space=smem, size = 0x4, offset = 0x4, fixed_abs, tag = 'smem constant byte address 0x4 - core index']
  #allocation1 [shape = 'u32[144,128]{1,0:T(1,128)}', space=vmem, size = 0x12000, scoped, tag = 'internal scratch']
  %s0 = inlined_call_operand.hbm [shape: f32[8,256], index: 0, kind: input, shape index: {}]
  %s1 = inlined_call_operand.hbm [shape: bf16[256,256], index: 1, kind: input, shape index: {}]
  %s2 = inlined_call_operand.hbm [shape: f32[1,256], index: 2, kind: input, shape index: {}]
  %s3 = inlined_call_operand.hbm [shape: f32[8,256], index: 3, kind: output, shape index: {}]
  %s4 = sld [smem:[#allocation0]]
  $region34: #{tt_autoencoder_forward.1} parent=0
    _
  %s6 = ssub.s32 1, %s4
  %s7 = scalar_select 0, %s6, %s4
  $region1: #{tt_autoencoder_forward.1} parent=0
    #allocation2 [shape = 'u8[8192]{0}', space=vmem, size = 0x2000, scoped, tag = 'input window, operand 0, single buffered']
    #allocation3 [shape = 's32[1]{0}', space=sflag, size = 0x4, scoped, tag = 'scoped memory for tt_autoencoder_forward.1']
    #allocation4 [shape = 's32[1]{0}', space=sflag, size = 0x4, scoped, tag = 'scoped memory for tt_autoencoder_forward.1']
    #allocation5 [shape = 'u8[131072]{0}', space=vmem, size = 0x20000, scoped, tag = 'input window, operand 1, single buffered']
    #allocation6 [shape = 's32[1]{0}', space=sflag, size = 0x4, scoped, tag = 'scoped memory for tt_autoencoder_forward.1']
    #allocation7 [shape = 'u8[1024]{0}', space=vmem, size = 0x400, scoped, tag = 'input window, operand 2, single buffered']
    #allocation8 [shape = 'u8[8192]{0}', space=vmem, size = 0x2000, scoped, tag = 'output window, operand 0, single buffered']
    %8 = vsyncpa [#allocation3], 0
    %9 = vsyncpa [#allocation6], 0
    %10 = vsyncpa [#allocation4], 0
    // Predicated region
    $region2: #{tt_autoencoder_forward.1} parent=1 // pred_check
      _
    $region3: #{tt_autoencoder_forward.1} parent=1 // pred_check_branch
      %12 = sbr.rel (0) target = $region5
    $region4: #{tt_autoencoder_forward.1} parent=1 // pred_region
      %s14 = ssub.s32 256, 256
      %15 = vsyncadd [#allocation3], %s14
      %s17 = sshll.u32 [#allocation2], 4
      %s18 = int_to_ptr.vmem [resolvable:$true] %s17
      %20 = dma.hbm_to_vmem [thread:$0]  %s0, 256, %s18, [#allocation3]
    $region5: #{tt_autoencoder_forward.1} parent=1 // pred_fallthru
      _
    // Predicated region
    $region6: #{tt_autoencoder_forward.1} parent=1 // pred_check
      _
    $region7: #{tt_autoencoder_forward.1} parent=1 // pred_check_branch
      %22 = sbr.rel (0) target = $region9
    $region8: #{tt_autoencoder_forward.1} parent=1 // pred_region
      %s24 = ssub.s32 4096, 4096
      %25 = vsyncadd [#allocation6], %s24
      %s26 = sshll.u32 [#allocation5], 4
      %s27 = int_to_ptr.vmem [resolvable:$true] %s26
      %32 = dma.hbm_to_vmem [thread:$0]  %s1, 4096, %s27, [#allocation6], 128, 128, 8
    $region9: #{tt_autoencoder_forward.1} parent=1 // pred_fallthru
      _
    // Predicated region
    $region10: #{tt_autoencoder_forward.1} parent=1 // pred_check
      _
    $region11: #{tt_autoencoder_forward.1} parent=1 // pred_check_branch
      %34 = sbr.rel (0) target = $region13
    $region12: #{tt_autoencoder_forward.1} parent=1 // pred_region
      %s36 = ssub.s32 32, 32
      %37 = vsyncadd [#allocation6], %s36
      %s39 = sshll.u32 [#allocation7], 4
      %s40 = int_to_ptr.vmem [resolvable:$true] %s39
      %42 = dma.hbm_to_vmem [thread:$0]  %s2, 32, %s40, [#allocation6]
    $region13: #{tt_autoencoder_forward.1} parent=1 // pred_fallthru
      _
    // Predicated region
    $region14: #{tt_autoencoder_forward.1} parent=1 // pred_check
      _
    $region15: #{tt_autoencoder_forward.1} parent=1 // pred_check_branch
      %44 = sbr.rel (0) target = $region17
    $region16: #{tt_autoencoder_forward.1} parent=1 // pred_region
      %45 = dma.done [#allocation3], 256
    $region17: #{tt_autoencoder_forward.1} parent=1 // pred_fallthru
      _
    // Predicated region
    $region18: #{tt_autoencoder_forward.1} parent=1 // pred_check
      _
    $region19: #{tt_autoencoder_forward.1} parent=1 // pred_check_branch
      %47 = sbr.rel (0) target = $region21
    $region20: #{tt_autoencoder_forward.1} parent=1 // pred_region
      %48 = dma.done [#allocation6], 4096
    $region21: #{tt_autoencoder_forward.1} parent=1 // pred_fallthru
      _
    // Predicated region
    $region22: #{tt_autoencoder_forward.1} parent=1 // pred_check
      _
    $region23: #{tt_autoencoder_forward.1} parent=1 // pred_check_branch
      %50 = sbr.rel (0) target = $region25
    $region24: #{tt_autoencoder_forward.1} parent=1 // pred_region
      %51 = dma.done [#allocation6], 32
    $region25: #{tt_autoencoder_forward.1} parent=1 // pred_fallthru
      _
    %v52 = vld [vmem:[#allocation2] sm:$0xff]
    %v53 = vld [vmem:[#allocation2 + $0x8] sm:$0xff]
    %v54 = vpack.c.bf16 %v52, %v52
    %v55 = vpack.c.bf16 %v53, %v53
    %v56 = vld [vmem:[#allocation5] sm:$0xff]
    %v57 = vld [vmem:[#allocation5 + $0x8] sm:$0xff]
    %v58 = vld [vmem:[#allocation5 + $0x10] sm:$0xff]
    %v59 = vld [vmem:[#allocation5 + $0x18] sm:$0xff]
    %v60 = vld [vmem:[#allocation5 + $0x20] sm:$0xff]
    %v61 = vld [vmem:[#allocation5 + $0x28] sm:$0xff]
    %v62 = vld [vmem:[#allocation5 + $0x30] sm:$0xff]
    %v63 = vld [vmem:[#allocation5 + $0x38] sm:$0xff]
    %v64 = vld [vmem:[#allocation5 + $0x40] sm:$0xff]
    %v65 = vld [vmem:[#allocation5 + $0x48] sm:$0xff]
    %v66 = vld [vmem:[#allocation5 + $0x50] sm:$0xff]
    %v67 = vld [vmem:[#allocation5 + $0x58] sm:$0xff]
    %v68 = vld [vmem:[#allocation5 + $0x60] sm:$0xff]
    %v69 = vld [vmem:[#allocation5 + $0x68] sm:$0xff]
    %v70 = vld [vmem:[#allocation5 + $0x70] sm:$0xff]
    %v71 = vld [vmem:[#allocation5 + $0x78] sm:$0xff]
    %v72 = vld [vmem:[#allocation5 + $0x80] sm:$0xff]
    %v73 = vld [vmem:[#allocation5 + $0x88] sm:$0xff]
    %v74 = vld [vmem:[#allocation5 + $0x90] sm:$0xff]
    %v75 = vld [vmem:[#allocation5 + $0x98] sm:$0xff]
    %v76 = vld [vmem:[#allocation5 + $0xa0] sm:$0xff]
    %v77 = vld [vmem:[#allocation5 + $0xa8] sm:$0xff]
    %v78 = vld [vmem:[#allocation5 + $0xb0] sm:$0xff]
    %v79 = vld [vmem:[#allocation5 + $0xb8] sm:$0xff]
    %v80 = vld [vmem:[#allocation5 + $0xc0] sm:$0xff]
    %v81 = vld [vmem:[#allocation5 + $0xc8] sm:$0xff]
    %v82 = vld [vmem:[#allocation5 + $0xd0] sm:$0xff]
    %v83 = vld [vmem:[#allocation5 + $0xd8] sm:$0xff]
    %v84 = vld [vmem:[#allocation5 + $0xe0] sm:$0xff]
    %v85 = vld [vmem:[#allocation5 + $0xe8] sm:$0xff]
    %v86 = vld [vmem:[#allocation5 + $0xf0] sm:$0xff]
    %v87 = vld [vmem:[#allocation5 + $0xf8] sm:$0xff]
    %v88 = vld [vmem:[#allocation7] sm:$0x3]
    %v90 = vlaneseq
    %v91 = vshrl.u32 %v90, 7
    %v92 = vsub.s32 0, %v91
    %v93 = vrot.slane %v88, %v92
    %v94 = vlaneseq
    %v95 = vshrl.u32 %v94, 7
    %v96 = vsub.s32 1, %v95
    %v97 = vrot.slane %v88, %v96
    %v132 = vunpack.c.l.b16 %v56
    %v133 = vunpack.c.h.b16 %v56
    %v134 = vunpack.c.l.b16 %v57
    %v135 = vunpack.c.h.b16 %v57
    %v136 = vunpack.c.l.b16 %v58
    %v137 = vunpack.c.h.b16 %v58
    %v138 = vunpack.c.l.b16 %v59
    %v139 = vunpack.c.h.b16 %v59
    %v140 = vunpack.c.l.b16 %v60
    %v141 = vunpack.c.h.b16 %v60
    %v142 = vunpack.c.l.b16 %v61
    %v143 = vunpack.c.h.b16 %v61
    %v144 = vunpack.c.l.b16 %v62
    %v145 = vunpack.c.h.b16 %v62
    %v146 = vunpack.c.l.b16 %v63
    %v147 = vunpack.c.h.b16 %v63
    %v148 = vunpack.c.l.b16 %v64
    %v149 = vunpack.c.h.b16 %v64
    %v150 = vunpack.c.l.b16 %v65
    %v151 = vunpack.c.h.b16 %v65
    %v152 = vunpack.c.l.b16 %v66
    %v153 = vunpack.c.h.b16 %v66
    %v154 = vunpack.c.l.b16 %v67
    %v155 = vunpack.c.h.b16 %v67
    %v156 = vunpack.c.l.b16 %v68
    %v157 = vunpack.c.h.b16 %v68
    %v158 = vunpack.c.l.b16 %v69
    %v159 = vunpack.c.h.b16 %v69
    %v160 = vunpack.c.l.b16 %v70
    %v161 = vunpack.c.h.b16 %v70
    %v162 = vunpack.c.l.b16 %v71
    %v163 = vunpack.c.h.b16 %v71
    %v164 = vunpack.c.l.b16 %v72
    %v165 = vunpack.c.h.b16 %v72
    %v166 = vunpack.c.l.b16 %v73
    %v167 = vunpack.c.h.b16 %v73
    %v168 = vunpack.c.l.b16 %v74
    %v169 = vunpack.c.h.b16 %v74
    %v170 = vunpack.c.l.b16 %v75
    %v171 = vunpack.c.h.b16 %v75
    %v172 = vunpack.c.l.b16 %v76
    %v173 = vunpack.c.h.b16 %v76
    %v174 = vunpack.c.l.b16 %v77
    %v175 = vunpack.c.h.b16 %v77
    %v176 = vunpack.c.l.b16 %v78
    %v177 = vunpack.c.h.b16 %v78
    %v178 = vunpack.c.l.b16 %v79
    %v179 = vunpack.c.h.b16 %v79
    %v180 = vunpack.c.l.b16 %v80
    %v181 = vunpack.c.h.b16 %v80
    %v182 = vunpack.c.l.b16 %v81
    %v183 = vunpack.c.h.b16 %v81
    %v184 = vunpack.c.l.b16 %v82
    %v185 = vunpack.c.h.b16 %v82
    %v186 = vunpack.c.l.b16 %v83
    %v187 = vunpack.c.h.b16 %v83
    %v188 = vunpack.c.l.b16 %v84
    %v189 = vunpack.c.h.b16 %v84
    %v190 = vunpack.c.l.b16 %v85
    %v191 = vunpack.c.h.b16 %v85
    %v192 = vunpack.c.l.b16 %v86
    %v193 = vunpack.c.h.b16 %v86
    %v194 = vunpack.c.l.b16 %v87
    %v195 = vunpack.c.h.b16 %v87
    %v196 = vpack.c.b16 %v134, %v132
    %v197 = vpack.c.b16 %v135, %v133
    %v198 = vpack.c.b16 %v138, %v136
    %v199 = vpack.c.b16 %v139, %v137
    %v200 = vpack.c.b16 %v142, %v140
    %v201 = vpack.c.b16 %v143, %v141
    %v202 = vpack.c.b16 %v146, %v144
    %v203 = vpack.c.b16 %v147, %v145
    %v204 = vpack.c.b16 %v150, %v148
    %v205 = vpack.c.b16 %v151, %v149
    %v206 = vpack.c.b16 %v154, %v152
    %v207 = vpack.c.b16 %v155, %v153
    %v208 = vpack.c.b16 %v158, %v156
    %v209 = vpack.c.b16 %v159, %v157
    %v210 = vpack.c.b16 %v162, %v160
    %v211 = vpack.c.b16 %v163, %v161
    %v212 = vpack.c.b16 %v166, %v164
    %v213 = vpack.c.b16 %v167, %v165
    %v214 = vpack.c.b16 %v170, %v168
    %v215 = vpack.c.b16 %v171, %v169
    %v216 = vpack.c.b16 %v174, %v172
    %v217 = vpack.c.b16 %v175, %v173
    %v218 = vpack.c.b16 %v178, %v176
    %v219 = vpack.c.b16 %v179, %v177
    %v220 = vpack.c.b16 %v182, %v180
    %v221 = vpack.c.b16 %v183, %v181
    %v222 = vpack.c.b16 %v186, %v184
    %v223 = vpack.c.b16 %v187, %v185
    %v224 = vpack.c.b16 %v190, %v188
    %v225 = vpack.c.b16 %v191, %v189
    %v226 = vpack.c.b16 %v194, %v192
    %v227 = vpack.c.b16 %v195, %v193
    %260 = vmatprep.subr.bf16.mxu0 %v211
    %261 = vmatpush1.bf16.msra.mxu0 %v210
    %262 = vmatprep.subr.bf16.mxu0 %v209
    %263 = vmatpush1.bf16.msra.mxu0 %v208
    %264 = vmatprep.subr.bf16.mxu0 %v207
    %265 = vmatpush1.bf16.msra.mxu0 %v206
    %266 = vmatprep.subr.bf16.mxu0 %v205
    %267 = vmatpush1.bf16.msra.mxu0 %v204
    %268 = vmatprep.subr.bf16.mxu0 %v203
    %269 = vmatpush1.bf16.msra.mxu0 %v202
    %270 = vmatprep.subr.bf16.mxu0 %v201
    %271 = vmatpush1.bf16.msra.mxu0 %v200
    %272 = vmatprep.subr.bf16.mxu0 %v199
    %273 = vmatpush1.bf16.msra.mxu0 %v198
    %274 = vmatprep.subr.bf16.mxu0 %v197
    %275 = vmatpush1.bf16.msra.mxu0 %v196
    %276 = vmatprep.subr.bf16.mxu0 %v227
    %277 = vmatpush2.bf16.msra.mxu0 %v226
    %278 = vmatprep.subr.bf16.mxu0 %v225
    %279 = vmatpush2.bf16.msra.mxu0 %v224
    %280 = vmatprep.subr.bf16.mxu0 %v223
    %281 = vmatpush2.bf16.msra.mxu0 %v222
    %282 = vmatprep.subr.bf16.mxu0 %v221
    %283 = vmatpush2.bf16.msra.mxu0 %v220
    %284 = vmatprep.subr.bf16.mxu0 %v219
    %285 = vmatpush2.bf16.msra.mxu0 %v218
    %286 = vmatprep.subr.bf16.mxu0 %v217
    %287 = vmatpush2.bf16.msra.mxu0 %v216
    %288 = vmatprep.subr.bf16.mxu0 %v215
    %289 = vmatpush2.bf16.msra.mxu0 %v214
    %290 = vmatprep.subr.bf16.mxu0 %v213
    %291 = vmatpush2.bf16.msra.mxu0 %v212
    %292 = vmatprep.mubr.bf16.mxu0 %v55
    %293 = vmatmul.mubr.bf16.gmra.mxu0 %v54
    %v294 = vpop.f32.mrf.mxu0
    %v295 = vadd.f32 %v93, %v294
    %v296 = vpop.f32.mrf.mxu0
    %v297 = vadd.f32 %v97, %v296
    %v298 = vpop.f32.mrf.mxu0
    %v299 = vpop.f32.mrf.mxu0
    %300 = vdwg.mxu0
    %v301 = vxor.u32 %v295, 2147483648
    %v302 = vxor.u32 %v297, 2147483648
    %v303 = vmul.f32 %v301, 1.442695
    %v304 = vpow.pop %v303
    %v305 = vmul.f32 %v302, 1.442695
    %v306 = vpow.pop %v305
    %v307 = vadd.f32 %v304, 1.0
    %v308 = vadd.f32 %v306, 1.0
    %v309 = vrcp.pop %v307
    %v310 = vmul.f32 1.0, %v309
    %v311 = vrcp.pop %v308
    %v312 = vmul.f32 1.0, %v311
    %313 = vst [vmem:[#allocation8] sm:$0xff] %v310
    %314 = vst [vmem:[#allocation8 + $0x8] sm:$0xff] %v312
    // Predicated region
    $region26: #{tt_autoencoder_forward.1} parent=1 // pred_check
      _
    $region27: #{tt_autoencoder_forward.1} parent=1 // pred_check_branch
      %316 = sbr.rel (0) target = $region29
    $region28: #{tt_autoencoder_forward.1} parent=1 // pred_region
      %s318 = ssub.s32 256, 256
      %319 = vsyncadd [#allocation4], %s318
      %s321 = sshll.u32 [#allocation8], 4
      %s322 = int_to_ptr.vmem [resolvable:$true] %s321
      %324 = dma.vmem_to_hbm [thread:$0]  %s322, 256, %s3, [#allocation4]
    $region29: #{tt_autoencoder_forward.1} parent=1 // pred_fallthru
      _
    // Predicated region
    $region30: #{tt_autoencoder_forward.1} parent=1 // pred_check
      _
    $region31: #{tt_autoencoder_forward.1} parent=1 // pred_check_branch
      %326 = sbr.rel (0) target = $region33
    $region32: #{tt_autoencoder_forward.1} parent=1 // pred_region
      %327 = dma.done [#allocation4], 256
    $region33: #{tt_autoencoder_forward.1} parent=1 // pred_fallthru
      _
    %328 = vsyncpa [#allocation3], 1
    %329 = vsyncpa [#allocation6], 1
    %330 = vsyncpa [#allocation4], 1

</llo_original>
